<compile_context>
chip_gen: v7x
topology: tpu7x:2x2x1
jax: 0.10.0
libtpu: 0.0.40
codegen_flags: <defaults>
</compile_context>

<pallas_src>
import functools

import jax
import jax.numpy as jnp
from jax.experimental import pallas as pl
from jax.experimental.pallas import tpu as pltpu


def _downsample_kernel(kflat_ref, x_ref, o_ref, *, ksize, stride, final, rows):
    # kflat_ref: SMEM (ksize*ksize,) float32, already abs-normalized.
    # x_ref:     VMEM (band_h, W, bc_tile)   input rows for this output-row band.
    # o_ref:     VMEM (rows, final, bc_tile) output band (lane-dense store).
    acc = None
    for ki in range(ksize):
        for kj in range(ksize):
            w = kflat_ref[ki * ksize + kj]        # scalar weight from SMEM
            # One strided, lane-dense slab per tap; offsets/strides are static.
            slab = x_ref[pl.ds(ki, rows, stride), pl.ds(kj, final, stride), :]
            # f32 accumulate (safe on v5e; on v6e/v7x a bf16 multiply with an
            # f32 accumulator would also do, but the kernel is HBM-bound).
            term = w * slab.astype(jnp.float32)
            acc = term if acc is None else acc + term
    o_ref[...] = acc.astype(o_ref.dtype)


def _plan(bc, h, w, ksize, stride, final, itemsize):
    """Choose (bc_tile, lane_pad, rows_per_band, band_in_h, vmem_limit_bytes).

    Budget = 2x double-buffered input block + 2x output block.  20 MiB keeps the
    total (plus headroom) safely inside v7x's 64 MiB physical VMEM and well
    within v5e/v6e."""
    block_budget = 20 << 20

    # Lane (B*C) tile candidates, widest first.
    if bc <= 128:
        lane_cands = [(bc, 0)]                      # full-width block, no pad
    else:
        lane_cands = [(t, 0)
                      for t in range(min(1024, bc // 128 * 128), 127, -128)
                      if bc % t == 0]
        if not lane_cands:
            lane_cands = [(128, (-bc) % 128)]       # pad B*C up to 128 lanes

    # Output-row band candidates (divisors of final, biggest first).  Banding
    # with plain Blocked specs needs non-overlapping row windows (ksize<=stride).
    if ksize <= stride and final > 1:
        row_cands = [r for r in range(final, 0, -1) if final % r == 0]
    else:
        # TODO(synk): ksize > stride (overlapping row windows) would need
        # pl.Element-style element-offset blocks to band H; fall back to full H.
        row_cands = [final]

    def cost(tile, rows):
        band_h = h if rows == final else rows * stride
        in_b = band_h * w * tile * itemsize
        out_b = rows * final * tile * itemsize
        return 2 * in_b + 2 * out_b, band_h

    pick = None
    for tile, pad in lane_cands:
        for rows in row_cands:
            bytes_needed, band_h = cost(tile, rows)
            if bytes_needed <= block_budget:
                pick = (tile, pad, rows, band_h, bytes_needed)
                break
        if pick is not None:
            break
    if pick is None:
        # Even the smallest config misses the budget: take it anyway and raise
        # the limit (may still fail on v7x's 64 MiB physical VMEM for extreme
        # shapes; banding would need pl.Element windows there).
        tile, pad = lane_cands[-1]
        rows = row_cands[-1]
        bytes_needed, band_h = cost(tile, rows)
        pick = (tile, pad, rows, band_h, bytes_needed)

    tile, pad, rows, band_h, bytes_needed = pick

    # v7x megacore: make sure there are >= 2 parallel grid steps when possible.
    n_bc = (bc + pad) // tile
    if n_bc * (final // rows) < 2 and len(row_cands) > 1:
        rows = row_cands[1]                         # largest proper divisor
        bytes_needed, band_h = cost(tile, rows)

    vmem_limit = int(min(max(bytes_needed + (8 << 20), 32 << 20), 128 << 20))
    return tile, pad, rows, band_h, vmem_limit


def simple_downsampler(imgs, guidance, kernel_params, final_size):
    """Pallas equivalent of SimpleDownsampler.forward(imgs, guidance).

    `guidance` is accepted (to mirror the torch signature) but unused, exactly
    like the reference module."""
    del guidance  # unused in the reference forward pass
    b, c, h, w = imgs.shape
    ksize = kernel_params.shape[0]
    # TODO(synk): final_size == 1 divides by zero here, exactly like PyTorch.
    stride = (h - ksize) // (final_size - 1)
    bc = b * c

    if (final_size - 1) * stride + ksize > w:
        raise ValueError("image width too small for final_size/kernel_size "
                         "(the PyTorch reference reshape would fail too)")

    # get_kernel(): normalize once in the wrapper, flatten for SMEM prefetch.
    k = jnp.abs(kernel_params.astype(jnp.float32))
    kflat = (k / jnp.sum(k)).reshape(-1)

    itemsize = jnp.dtype(imgs.dtype).itemsize
    bc_tile, pad, rows_per_band, band_in_h, vmem_limit = _plan(
        bc, h, w, ksize, stride, final_size, itemsize)

    # NCHW -> (H, W, B*C): batch*channel on lanes for lane-dense loads/stores.
    x_hwc = jnp.transpose(imgs.reshape(bc, h, w), (1, 2, 0))
    if pad:
        x_hwc = jnp.pad(x_hwc, ((0, 0), (0, 0), (0, pad)))
    bc_total = bc + pad

    n_bands = final_size // rows_per_band
    grid = (bc_total // bc_tile, n_bands)

    out = pl.pallas_call(
        functools.partial(
            _downsample_kernel,
            ksize=ksize, stride=stride, final=final_size, rows=rows_per_band),
        out_shape=jax.ShapeDtypeStruct(
            (final_size, final_size, bc_total), imgs.dtype),
        grid_spec=pltpu.PrefetchScalarGridSpec(
            num_scalar_prefetch=1,            # kflat -> SMEM
            grid=grid,
            in_specs=[
                pl.BlockSpec((band_in_h, w, bc_tile),
                             lambda i, j, kf: (j, 0, i)),
            ],
            out_specs=pl.BlockSpec((rows_per_band, final_size, bc_tile),
                                   lambda i, j, kf: (j, 0, i)),
        ),
        compiler_params=pltpu.CompilerParams(
            dimension_semantics=("parallel", "parallel"),
            vmem_limit_bytes=vmem_limit),
    )(kflat, x_hwc)

    out = out[:, :, :bc]                                  # drop lane padding
    return jnp.transpose(out, (2, 0, 1)).reshape(b, c, final_size, final_size)


def _reference(imgs, kernel_params, final_size):
    """Pure-JAX reference matching the PyTorch semantics."""
    b, c, h, w = imgs.shape
    ksize = kernel_params.shape[0]
    stride = (h - ksize) // (final_size - 1)
    k = jnp.abs(kernel_params)
    k = k / k.sum()
    x = imgs.reshape(b * c, 1, h, w)
    out = jax.lax.conv_general_dilated(
        x, k[None, None, :, :],
        window_strides=(stride, stride), padding="VALID",
        dimension_numbers=("NCHW", "OIHW", "NCHW"))
    return out.reshape(b, c, final_size, final_size)


if __name__ == "__main__":
    key = jax.random.PRNGKey(0)
    k1, k2, k3 = jax.random.split(key, 3)

    B, C, H, W = 2, 4, 16, 16
    KERNEL_SIZE, FINAL_SIZE = 4, 4  # stride = (16 - 4) // (4 - 1) = 4 -> 4x4 out

    imgs = jax.random.normal(k1, (B, C, H, W), dtype=jnp.float32)
    guidance = jax.random.normal(k2, (B, C, H, W), dtype=jnp.float32)  # unused
    kernel_params = jax.random.normal(k3, (KERNEL_SIZE, KERNEL_SIZE),
                                      dtype=jnp.float32)

    out = simple_downsampler(imgs, guidance, kernel_params, FINAL_SIZE)
    out = jax.block_until_ready(out)

    ref = _reference(imgs, kernel_params, FINAL_SIZE)
    assert out.shape == (B, C, FINAL_SIZE, FINAL_SIZE), out.shape
    assert out.dtype == imgs.dtype, out.dtype
    assert jnp.allclose(out, ref, atol=1e-2, rtol=1e-2), \
        float(jnp.max(jnp.abs(out - ref)))

    print("KERNEL_OK")
</pallas_src>

<mosaic_0001>
module attributes {stable_mosaic.version = 11 : i64} {
  func.func @_downsample_kernel(%arg0: i32, %arg1: i32, %arg2: memref<16xf32, #tpu.memory_space<smem>>, %arg3: memref<8x16x8xf32, #tpu.memory_space<vmem>>, %arg4: memref<2x4x8xf32, #tpu.memory_space<vmem>>) attributes {dimension_semantics = [#tpu.dimension_semantics<parallel>, #tpu.dimension_semantics<parallel>], iteration_bounds = array<i64: 1, 2>, scalar_prefetch = 1 : i64, scratch_operands = 0 : i64, tpu.core_type = #tpu.core_type<tc>, window_params = [{transform_indices = @transform_0, window_bounds = array<i64: 8, 16, 8>}, {transform_indices = @transform_1, window_bounds = array<i64: 2, 4, 8>}]} {
    %c0 = arith.constant 0 : index
    %0 = memref.load %arg2[%c0] : memref<16xf32, #tpu.memory_space<smem>>
    %c0_0 = arith.constant 0 : index
    %c0_1 = arith.constant 0 : index
    %c0_2 = arith.constant 0 : index
    %1 = tpu.strided_load %arg3[%c0_0, %c0_1, %c0_2] {strides = array<i32: 4, 4, 1>} : memref<8x16x8xf32, #tpu.memory_space<vmem>>, vector<2x4x8xf32>
    %2 = vector.broadcast %0 : f32 to vector<2x4x8xf32>
    %3 = arith.mulf %2, %1 : vector<2x4x8xf32>
    %c1 = arith.constant 1 : index
    %4 = memref.load %arg2[%c1] : memref<16xf32, #tpu.memory_space<smem>>
    %c0_3 = arith.constant 0 : index
    %c1_4 = arith.constant 1 : index
    %c0_5 = arith.constant 0 : index
    %5 = tpu.strided_load %arg3[%c0_3, %c1_4, %c0_5] {strides = array<i32: 4, 4, 1>} : memref<8x16x8xf32, #tpu.memory_space<vmem>>, vector<2x4x8xf32>
    %6 = vector.broadcast %4 : f32 to vector<2x4x8xf32>
    %7 = arith.mulf %6, %5 : vector<2x4x8xf32>
    %8 = arith.addf %3, %7 : vector<2x4x8xf32>
    %c2 = arith.constant 2 : index
    %9 = memref.load %arg2[%c2] : memref<16xf32, #tpu.memory_space<smem>>
    %c0_6 = arith.constant 0 : index
    %c2_7 = arith.constant 2 : index
    %c0_8 = arith.constant 0 : index
    %10 = tpu.strided_load %arg3[%c0_6, %c2_7, %c0_8] {strides = array<i32: 4, 4, 1>} : memref<8x16x8xf32, #tpu.memory_space<vmem>>, vector<2x4x8xf32>
    %11 = vector.broadcast %9 : f32 to vector<2x4x8xf32>
    %12 = arith.mulf %11, %10 : vector<2x4x8xf32>
    %13 = arith.addf %8, %12 : vector<2x4x8xf32>
    %c3 = arith.constant 3 : index
    %14 = memref.load %arg2[%c3] : memref<16xf32, #tpu.memory_space<smem>>
    %c0_9 = arith.constant 0 : index
    %c3_10 = arith.constant 3 : index
    %c0_11 = arith.constant 0 : index
    %15 = tpu.strided_load %arg3[%c0_9, %c3_10, %c0_11] {strides = array<i32: 4, 4, 1>} : memref<8x16x8xf32, #tpu.memory_space<vmem>>, vector<2x4x8xf32>
    %16 = vector.broadcast %14 : f32 to vector<2x4x8xf32>
    %17 = arith.mulf %16, %15 : vector<2x4x8xf32>
    %18 = arith.addf %13, %17 : vector<2x4x8xf32>
    %c4 = arith.constant 4 : index
    %19 = memref.load %arg2[%c4] : memref<16xf32, #tpu.memory_space<smem>>
    %c1_12 = arith.constant 1 : index
    %c0_13 = arith.constant 0 : index
    %c0_14 = arith.constant 0 : index
    %20 = tpu.strided_load %arg3[%c1_12, %c0_13, %c0_14] {strides = array<i32: 4, 4, 1>} : memref<8x16x8xf32, #tpu.memory_space<vmem>>, vector<2x4x8xf32>
    %21 = vector.broadcast %19 : f32 to vector<2x4x8xf32>
    %22 = arith.mulf %21, %20 : vector<2x4x8xf32>
    %23 = arith.addf %18, %22 : vector<2x4x8xf32>
    %c5 = arith.constant 5 : index
    %24 = memref.load %arg2[%c5] : memref<16xf32, #tpu.memory_space<smem>>
    %c1_15 = arith.constant 1 : index
    %c1_16 = arith.constant 1 : index
    %c0_17 = arith.constant 0 : index
    %25 = tpu.strided_load %arg3[%c1_15, %c1_16, %c0_17] {strides = array<i32: 4, 4, 1>} : memref<8x16x8xf32, #tpu.memory_space<vmem>>, vector<2x4x8xf32>
    %26 = vector.broadcast %24 : f32 to vector<2x4x8xf32>
    %27 = arith.mulf %26, %25 : vector<2x4x8xf32>
    %28 = arith.addf %23, %27 : vector<2x4x8xf32>
    %c6 = arith.constant 6 : index
    %29 = memref.load %arg2[%c6] : memref<16xf32, #tpu.memory_space<smem>>
    %c1_18 = arith.constant 1 : index
    %c2_19 = arith.constant 2 : index
    %c0_20 = arith.constant 0 : index
    %30 = tpu.strided_load %arg3[%c1_18, %c2_19, %c0_20] {strides = array<i32: 4, 4, 1>} : memref<8x16x8xf32, #tpu.memory_space<vmem>>, vector<2x4x8xf32>
    %31 = vector.broadcast %29 : f32 to vector<2x4x8xf32>
    %32 = arith.mulf %31, %30 : vector<2x4x8xf32>
    %33 = arith.addf %28, %32 : vector<2x4x8xf32>
    %c7 = arith.constant 7 : index
    %34 = memref.load %arg2[%c7] : memref<16xf32, #tpu.memory_space<smem>>
    %c1_21 = arith.constant 1 : index
    %c3_22 = arith.constant 3 : index
    %c0_23 = arith.constant 0 : index
    %35 = tpu.strided_load %arg3[%c1_21, %c3_22, %c0_23] {strides = array<i32: 4, 4, 1>} : memref<8x16x8xf32, #tpu.memory_space<vmem>>, vector<2x4x8xf32>
    %36 = vector.broadcast %34 : f32 to vector<2x4x8xf32>
    %37 = arith.mulf %36, %35 : vector<2x4x8xf32>
    %38 = arith.addf %33, %37 : vector<2x4x8xf32>
    %c8 = arith.constant 8 : index
    %39 = memref.load %arg2[%c8] : memref<16xf32, #tpu.memory_space<smem>>
    %c2_24 = arith.constant 2 : index
    %c0_25 = arith.constant 0 : index
    %c0_26 = arith.constant 0 : index
    %40 = tpu.strided_load %arg3[%c2_24, %c0_25, %c0_26] {strides = array<i32: 4, 4, 1>} : memref<8x16x8xf32, #tpu.memory_space<vmem>>, vector<2x4x8xf32>
    %41 = vector.broadcast %39 : f32 to vector<2x4x8xf32>
    %42 = arith.mulf %41, %40 : vector<2x4x8xf32>
    %43 = arith.addf %38, %42 : vector<2x4x8xf32>
    %c9 = arith.constant 9 : index
    %44 = memref.load %arg2[%c9] : memref<16xf32, #tpu.memory_space<smem>>
    %c2_27 = arith.constant 2 : index
    %c1_28 = arith.constant 1 : index
    %c0_29 = arith.constant 0 : index
    %45 = tpu.strided_load %arg3[%c2_27, %c1_28, %c0_29] {strides = array<i32: 4, 4, 1>} : memref<8x16x8xf32, #tpu.memory_space<vmem>>, vector<2x4x8xf32>
    %46 = vector.broadcast %44 : f32 to vector<2x4x8xf32>
    %47 = arith.mulf %46, %45 : vector<2x4x8xf32>
    %48 = arith.addf %43, %47 : vector<2x4x8xf32>
    %c10 = arith.constant 10 : index
    %49 = memref.load %arg2[%c10] : memref<16xf32, #tpu.memory_space<smem>>
    %c2_30 = arith.constant 2 : index
    %c2_31 = arith.constant 2 : index
    %c0_32 = arith.constant 0 : index
    %50 = tpu.strided_load %arg3[%c2_30, %c2_31, %c0_32] {strides = array<i32: 4, 4, 1>} : memref<8x16x8xf32, #tpu.memory_space<vmem>>, vector<2x4x8xf32>
    %51 = vector.broadcast %49 : f32 to vector<2x4x8xf32>
    %52 = arith.mulf %51, %50 : vector<2x4x8xf32>
    %53 = arith.addf %48, %52 : vector<2x4x8xf32>
    %c11 = arith.constant 11 : index
    %54 = memref.load %arg2[%c11] : memref<16xf32, #tpu.memory_space<smem>>
    %c2_33 = arith.constant 2 : index
    %c3_34 = arith.constant 3 : index
    %c0_35 = arith.constant 0 : index
    %55 = tpu.strided_load %arg3[%c2_33, %c3_34, %c0_35] {strides = array<i32: 4, 4, 1>} : memref<8x16x8xf32, #tpu.memory_space<vmem>>, vector<2x4x8xf32>
    %56 = vector.broadcast %54 : f32 to vector<2x4x8xf32>
    %57 = arith.mulf %56, %55 : vector<2x4x8xf32>
    %58 = arith.addf %53, %57 : vector<2x4x8xf32>
    %c12 = arith.constant 12 : index
    %59 = memref.load %arg2[%c12] : memref<16xf32, #tpu.memory_space<smem>>
    %c3_36 = arith.constant 3 : index
    %c0_37 = arith.constant 0 : index
    %c0_38 = arith.constant 0 : index
    %60 = tpu.strided_load %arg3[%c3_36, %c0_37, %c0_38] {strides = array<i32: 4, 4, 1>} : memref<8x16x8xf32, #tpu.memory_space<vmem>>, vector<2x4x8xf32>
    %61 = vector.broadcast %59 : f32 to vector<2x4x8xf32>
    %62 = arith.mulf %61, %60 : vector<2x4x8xf32>
    %63 = arith.addf %58, %62 : vector<2x4x8xf32>
    %c13 = arith.constant 13 : index
    %64 = memref.load %arg2[%c13] : memref<16xf32, #tpu.memory_space<smem>>
    %c3_39 = arith.constant 3 : index
    %c1_40 = arith.constant 1 : index
    %c0_41 = arith.constant 0 : index
    %65 = tpu.strided_load %arg3[%c3_39, %c1_40, %c0_41] {strides = array<i32: 4, 4, 1>} : memref<8x16x8xf32, #tpu.memory_space<vmem>>, vector<2x4x8xf32>
    %66 = vector.broadcast %64 : f32 to vector<2x4x8xf32>
    %67 = arith.mulf %66, %65 : vector<2x4x8xf32>
    %68 = arith.addf %63, %67 : vector<2x4x8xf32>
    %c14 = arith.constant 14 : index
    %69 = memref.load %arg2[%c14] : memref<16xf32, #tpu.memory_space<smem>>
    %c3_42 = arith.constant 3 : index
    %c2_43 = arith.constant 2 : index
    %c0_44 = arith.constant 0 : index
    %70 = tpu.strided_load %arg3[%c3_42, %c2_43, %c0_44] {strides = array<i32: 4, 4, 1>} : memref<8x16x8xf32, #tpu.memory_space<vmem>>, vector<2x4x8xf32>
    %71 = vector.broadcast %69 : f32 to vector<2x4x8xf32>
    %72 = arith.mulf %71, %70 : vector<2x4x8xf32>
    %73 = arith.addf %68, %72 : vector<2x4x8xf32>
    %c15 = arith.constant 15 : index
    %74 = memref.load %arg2[%c15] : memref<16xf32, #tpu.memory_space<smem>>
    %c3_45 = arith.constant 3 : index
    %c3_46 = arith.constant 3 : index
    %c0_47 = arith.constant 0 : index
    %75 = tpu.strided_load %arg3[%c3_45, %c3_46, %c0_47] {strides = array<i32: 4, 4, 1>} : memref<8x16x8xf32, #tpu.memory_space<vmem>>, vector<2x4x8xf32>
    %76 = vector.broadcast %74 : f32 to vector<2x4x8xf32>
    %77 = arith.mulf %76, %75 : vector<2x4x8xf32>
    %78 = arith.addf %73, %77 : vector<2x4x8xf32>
    %c0_48 = arith.constant 0 : index
    %c0_49 = arith.constant 0 : index
    %c0_50 = arith.constant 0 : index
    %79 = vector.load %arg4[%c0_48, %c0_49, %c0_50] : memref<2x4x8xf32, #tpu.memory_space<vmem>>, vector<2x4x8xf32>
    tpu.vector_store %arg4[%c0_48, %c0_49, %c0_50], %78 {strides = array<i32>} : memref<2x4x8xf32, #tpu.memory_space<vmem>>, vector<2x4x8xf32>,
    return
  }
  func.func @transform_0(%arg0: i32, %arg1: i32, %arg2: memref<16xf32, #tpu.memory_space<smem>>) -> (i32, i32, i32) {
    %c0_i32 = arith.constant 0 : i32
    %c0_i32_0 = arith.constant 0 : i32
    return %arg1, %c0_i32, %arg0 : i32, i32, i32
  }
  func.func @transform_1(%arg0: i32, %arg1: i32, %arg2: memref<16xf32, #tpu.memory_space<smem>>) -> (i32, i32, i32) {
    %c0_i32 = arith.constant 0 : i32
    %c0_i32_0 = arith.constant 0 : i32
    return %arg1, %c0_i32, %arg0 : i32, i32, i32
  }
}

</mosaic_0001>

<llo_original>
// kernel: tpu_custom_call.1
$region0: #{tpu_custom_call.1}
  #allocation0 [shape = 'u32[]', space=smem, size = 0x4, offset = 0x4, fixed_abs, tag = 'smem constant byte address 0x4 - core index']
  #allocation1 [shape = 'u32[144,128]{1,0:T(1,128)}', space=vmem, size = 0x12000, scoped, tag = 'internal scratch']
  #allocation2 [shape = 's32[1]{0}', space=sflag, size = 0x4, scoped, tag = 'scoped memory for tpu_custom_call.1']
  #allocation3 [shape = 'u8[512]{0}', space=smem, size = 0x200, scoped, tag = 'prefetched SMEM operand 0']
  %s0 = inlined_call_operand.vmem [shape: f32[16], index: 0, kind: input, shape index: {}]
  %s1 = inlined_call_operand.vmem [shape: f32[16,16,8], index: 1, kind: input, shape index: {}]
  %s2 = inlined_call_operand.hbm [shape: f32[4,4,8], index: 2, kind: output, shape index: {}]
  %s3 = sld [smem:[#allocation0]]
  $region37: #{tpu_custom_call.1} parent=0
    _
  %s5 = ssub.s32 1, %s3
  %s6 = scalar_select 0, %s5, %s3
  %s7 = sshll.u32 %s0, 4
  %s8 = int_to_ptr.vmem [resolvable:$true] %s7
  %10 = dma.vmem_to_smem %s8, 16, [#allocation3], [#allocation2]
  %11 = dma.done [#allocation2], 16
  %12 = sfence
  $region1: #{tpu_custom_call.1} parent=0
    #allocation4 [shape = 'u8[8192]{0}', space=vmem, size = 0x2000, scoped, tag = 'output window, operand 0']
    #allocation5 [shape = 's32[2]{0}', space=sflag, size = 0x8, scoped, tag = 'scoped memory for tpu_custom_call.1']
    %13 = vsyncpa [#allocation5], 0
    %s14 = scalar_lea.sflag [#allocation5], 1
    %15 = vsyncpa %s14, 0
    loop: start=0, step=1, limit=4
    $region2: #{tpu_custom_call.1} parent=1 // loop_pre_header
      _
    $region3: #{tpu_custom_call.1} parent=1 // loop_header
      %s17 = sphi 0, %s21
      %p18 = scmp.ge.s32.totalorder %s17, 4
      %s24 = sphi 0, %s36
      %s25 = sphi 0, %s32
      %s26 = sphi 0, %s24
      %s27 = sphi 0, %s25
      %s28 = sphi 0, %s26
      %s29 = sphi 0, %s27
      %s41 = sphi 0, %s43
      %s44 = sphi 0, %s41
      %s45 = sphi 0, %s44
      %s61 = sphi 0, %s45
      %s69 = sphi 0, %s71
      %s72 = sphi 0, %s69
      %s73 = sphi 0, %s72
      %s89 = sphi 0, %s73
    $region4: #{tpu_custom_call.1} parent=1 // loop_header_branch
      %20 = sbr.rel (%p18) target = $region8
    $region5: #{tpu_custom_call.1} parent=1 // loop_body
      %s22 = ssub.s32 %s17, 1
      %s23 = ssub.s32 %s17, 2
      %s30 = sadd.s32 1, %s25
      %p31 = scmp.ge.s32.totalorder %s30, 2
      %s32 = scalar_select %p31, 0, %s30
      %s33 = sadd.s32 1, %s24
      %s34 = scalar_select %p31, %s33, %s24
      %p35 = scmp.ge.s32.totalorder %s34, 1
      %s36 = scalar_select %p35, 0, %s34
      %s37 = ssub.s32 %s25, %s32
      %s38 = ssub.s32 %s24, %s36
      %s39 = sor.u32 %s37, %s38
      %p40 = scmp.eq.s32.totalorder %s39, 0
      %s42 = sadd.s32 %s41, 1
      %s43 = scalar_select %p40, %s41, %s42
      %p46 = pneg %p40
      %p47 = scmp.eq.s32.totalorder %s17, 1
      %p48 = por %p46, %p47
      %p49 = scmp.ne.s32.totalorder %s41, %s44
      %p50 = scmp.eq.s32.totalorder %s17, 0
      %p51 = por %p49, %p50
      %p52 = scmp.ne.s32.totalorder %s41, %s44
      %p53 = scmp.eq.s32.totalorder %s22, 1
      %p54 = por %p52, %p53
      %p55 = scmp.ne.s32.totalorder %s44, %s45
      %p56 = scmp.eq.s32.totalorder %s22, 0
      %p57 = por %p55, %p56
      %p58 = scmp.ne.s32.totalorder %s44, %s45
      %p59 = scmp.eq.s32.totalorder %s23, 1
      %p60 = por %p58, %p59
      %p62 = scmp.ne.s32.totalorder %s45, %s61
      %p63 = scmp.eq.s32.totalorder %s23, 0
      %p64 = por %p62, %p63
      %s65 = ssub.s32 %s25, %s32
      %s66 = ssub.s32 %s24, %s36
      %s67 = sor.u32 %s65, %s66
      %p68 = scmp.eq.s32.totalorder %s67, 0
      %s70 = sadd.s32 %s69, 1
      %s71 = scalar_select %p68, %s69, %s70
      %p74 = pneg %p68
      %p75 = scmp.eq.s32.totalorder %s17, 1
      %p76 = por %p74, %p75
      %p77 = scmp.ne.s32.totalorder %s69, %s72
      %p78 = scmp.eq.s32.totalorder %s17, 0
      %p79 = por %p77, %p78
      %p80 = scmp.ne.s32.totalorder %s69, %s72
      %p81 = scmp.eq.s32.totalorder %s22, 1
      %p82 = por %p80, %p81
      %p83 = scmp.ne.s32.totalorder %s72, %s73
      %p84 = scmp.eq.s32.totalorder %s22, 0
      %p85 = por %p83, %p84
      %p86 = scmp.ne.s32.totalorder %s72, %s73
      %p87 = scmp.eq.s32.totalorder %s23, 1
      %p88 = por %p86, %p87
      %p90 = scmp.ne.s32.totalorder %s73, %s89
      %p91 = scmp.eq.s32.totalorder %s23, 0
      %p92 = por %p90, %p91
      %p93 = scmp.le.s32.totalorder 1, %s17
      %p94 = scmp.lt.s32.totalorder %s17, 3
      %p95 = pnand %p93, %p94
      %p96 = pneg %p95
      // Predicated region
      $region9: #{tpu_custom_call.1} parent=5 // pred_check
        _
      $region10: #{tpu_custom_call.1} parent=5 // pred_check_branch
        %98 = sbr.rel (%p95) target = $region12
      $region11: #{tpu_custom_call.1} parent=5 // pred_region
        %s99 = ssub.s32 %s17, 1
      $region12: #{tpu_custom_call.1} parent=5 // pred_fallthru
        _
      %p100 = scmp.lt.s32.totalorder %s17, 2
      // Predicated region
      $region13: #{tpu_custom_call.1} parent=5 // pred_check
        %p101 = pneg %p100
      $region14: #{tpu_custom_call.1} parent=5 // pred_check_branch
        %103 = sbr.rel (%p101) target = $region16
      $region15: #{tpu_custom_call.1} parent=5 // pred_region
        // Predicated region
        $region17: #{tpu_custom_call.1} parent=15 // pred_check
          %p104 = pneg %p51
        $region18: #{tpu_custom_call.1} parent=15 // pred_check_branch
          %106 = sbr.rel (%p104) target = $region20
        $region19: #{tpu_custom_call.1} parent=15 // pred_region
          %s107 = smul.u32 8, %s25
          %p108 = scmp.lt.s32.totalorder %s107, 15
          %s109 = scalar_select %p108, %s107, 15
          %p110 = scmp.lt.s32.totalorder %s24, 0
          %s111 = scalar_select %p110, %s24, 0
          %s112 = smul.addr %s109, 2
          %s113 = sadd.s32 %s111, %s112
          %s114 = smul.addr %s113, 8
          %s115 = scalar_lea.vmem %s1, %s114
          %s116 = smul.u32 8, %s25
        $region20: #{tpu_custom_call.1} parent=15 // pred_fallthru
          _
      $region16: #{tpu_custom_call.1} parent=5 // pred_fallthru
        _
      %p117 = scmp.le.s32.totalorder 1, %s17
      %p118 = scmp.lt.s32.totalorder %s17, 3
      %p119 = pnand %p117, %p118
      %p120 = pneg %p119
      // Predicated region
      $region21: #{tpu_custom_call.1} parent=5 // pred_check
        _
      $region22: #{tpu_custom_call.1} parent=5 // pred_check_branch
        %122 = sbr.rel (%p119) target = $region24
      $region23: #{tpu_custom_call.1} parent=5 // pred_region
        %s123 = ssub.s32 %s17, 1
        %s124 = smul.u32 8, %s27
        %p125 = scmp.lt.s32.totalorder %s124, 15
        %s126 = scalar_select %p125, %s124, 15
        %p127 = scmp.lt.s32.totalorder %s26, 0
        %s128 = scalar_select %p127, %s26, 0
        %s129 = smul.addr %s126, 2
        %s130 = sadd.s32 %s128, %s129
        %s131 = smul.addr %s130, 8
        %s132 = scalar_lea.vmem %s1, %s131
        %p133 = pneg %p57
        %p134 = pneg %p54
        %p135 = pneg %p85
        %p136 = pneg %p82
        %s137 = sand.u32 %s72, 1
        %s138 = scalar_lea.sflag [#allocation5], %s137
        %s139 = sand.u32 %s72, 1
        %s140 = smul.addr %s139, 8
        %s141 = scalar_lea.vmem [#allocation4], %s140
        %s142 = smul.u32 8, %s27
        %p143 = scmp.lt.s32.totalorder %s142, 15
        %s144 = scalar_select %p143, %s142, 15
        %p145 = scmp.lt.s32.totalorder %s26, 0
        %s146 = scalar_select %p145, %s26, 0
        %s147 = smul.addr %s144, 2
        %s148 = sadd.s32 %s146, %s147
        %s149 = smul.addr %s148, 8
        %s150 = scalar_lea.vmem %s1, %s149
        %s151 = smul.u32 8, %s27
        %s152 = smul.u32 2, %s27
        %s153 = sld [smem:[#allocation3]]
        %v154 = vld [vmem:[%s150] ss:$4 sm:$0xf]
        %s155 = scalar_lea.vmem %s150, 64
        %v156 = vld [vmem:[%s155] ss:$4 sm:$0xf]
        %v157 = vstv %s153
        %v158 = vmul.f32 %v157, %v154
        %v159 = vmul.f32 %v157, %v156
        %s160 = sld [smem:[#allocation3 + $0x1]]
        %s161 = scalar_lea.vmem %s150, 1
        %v162 = vld [vmem:[%s161] ss:$4 sm:$0xf]
        %s163 = scalar_lea.vmem %s150, 65
        %v164 = vld [vmem:[%s163] ss:$4 sm:$0xf]
        %v165 = vstv %s160
        %v166 = vmul.f32 %v165, %v162
        %v167 = vmul.f32 %v165, %v164
        %v168 = vadd.f32 %v158, %v166
        %v169 = vadd.f32 %v159, %v167
        %s170 = sld [smem:[#allocation3 + $0x2]]
        %s171 = scalar_lea.vmem %s150, 2
        %v172 = vld [vmem:[%s171] ss:$4 sm:$0xf]
        %s173 = scalar_lea.vmem %s150, 66
        %v174 = vld [vmem:[%s173] ss:$4 sm:$0xf]
        %v175 = vstv %s170
        %v176 = vmul.f32 %v175, %v172
        %v177 = vmul.f32 %v175, %v174
        %v178 = vadd.f32 %v168, %v176
        %v179 = vadd.f32 %v169, %v177
        %s180 = sld [smem:[#allocation3 + $0x3]]
        %s181 = scalar_lea.vmem %s150, 3
        %v182 = vld [vmem:[%s181] ss:$4 sm:$0xf]
        %s183 = scalar_lea.vmem %s150, 67
        %v184 = vld [vmem:[%s183] ss:$4 sm:$0xf]
        %v185 = vstv %s180
        %v186 = vmul.f32 %v185, %v182
        %v187 = vmul.f32 %v185, %v184
        %v188 = vadd.f32 %v178, %v186
        %v189 = vadd.f32 %v179, %v187
        %s190 = sld [smem:[#allocation3 + $0x4]]
        %s191 = scalar_lea.vmem %s150, 16
        %v192 = vld [vmem:[%s191] ss:$4 sm:$0xf]
        %s193 = scalar_lea.vmem %s191, 64
        %v194 = vld [vmem:[%s193] ss:$4 sm:$0xf]
        %v195 = vstv %s190
        %v196 = vmul.f32 %v195, %v192
        %v197 = vmul.f32 %v195, %v194
        %v198 = vadd.f32 %v188, %v196
        %v199 = vadd.f32 %v189, %v197
        %s200 = sld [smem:[#allocation3 + $0x5]]
        %s201 = scalar_lea.vmem %s191, 1
        %v202 = vld [vmem:[%s201] ss:$4 sm:$0xf]
        %s203 = scalar_lea.vmem %s191, 65
        %v204 = vld [vmem:[%s203] ss:$4 sm:$0xf]
        %v205 = vstv %s200
        %v206 = vmul.f32 %v205, %v202
        %v207 = vmul.f32 %v205, %v204
        %v208 = vadd.f32 %v198, %v206
        %v209 = vadd.f32 %v199, %v207
        %s210 = sld [smem:[#allocation3 + $0x6]]
        %s211 = scalar_lea.vmem %s191, 2
        %v212 = vld [vmem:[%s211] ss:$4 sm:$0xf]
        %s213 = scalar_lea.vmem %s191, 66
        %v214 = vld [vmem:[%s213] ss:$4 sm:$0xf]
        %v215 = vstv %s210
        %v216 = vmul.f32 %v215, %v212
        %v217 = vmul.f32 %v215, %v214
        %v218 = vadd.f32 %v208, %v216
        %v219 = vadd.f32 %v209, %v217
        %s220 = sld [smem:[#allocation3 + $0x7]]
        %s221 = scalar_lea.vmem %s191, 3
        %v222 = vld [vmem:[%s221] ss:$4 sm:$0xf]
        %s223 = scalar_lea.vmem %s191, 67
        %v224 = vld [vmem:[%s223] ss:$4 sm:$0xf]
        %v225 = vstv %s220
        %v226 = vmul.f32 %v225, %v222
        %v227 = vmul.f32 %v225, %v224
        %v228 = vadd.f32 %v218, %v226
        %v229 = vadd.f32 %v219, %v227
        %s230 = sld [smem:[#allocation3 + $0x8]]
        %s231 = scalar_lea.vmem %s150, 32
        %v232 = vld [vmem:[%s231] ss:$4 sm:$0xf]
        %s233 = scalar_lea.vmem %s231, 64
        %v234 = vld [vmem:[%s233] ss:$4 sm:$0xf]
        %v235 = vstv %s230
        %v236 = vmul.f32 %v235, %v232
        %v237 = vmul.f32 %v235, %v234
        %v238 = vadd.f32 %v228, %v236
        %v239 = vadd.f32 %v229, %v237
        %s240 = sld [smem:[#allocation3 + $0x9]]
        %s241 = scalar_lea.vmem %s231, 1
        %v242 = vld [vmem:[%s241] ss:$4 sm:$0xf]
        %s243 = scalar_lea.vmem %s231, 65
        %v244 = vld [vmem:[%s243] ss:$4 sm:$0xf]
        %v245 = vstv %s240
        %v246 = vmul.f32 %v245, %v242
        %v247 = vmul.f32 %v245, %v244
        %v248 = vadd.f32 %v238, %v246
        %v249 = vadd.f32 %v239, %v247
        %s250 = sld [smem:[#allocation3 + $0xa]]
        %s251 = scalar_lea.vmem %s231, 2
        %v252 = vld [vmem:[%s251] ss:$4 sm:$0xf]
        %s253 = scalar_lea.vmem %s231, 66
        %v254 = vld [vmem:[%s253] ss:$4 sm:$0xf]
        %v255 = vstv %s250
        %v256 = vmul.f32 %v255, %v252
        %v257 = vmul.f32 %v255, %v254
        %v258 = vadd.f32 %v248, %v256
        %v259 = vadd.f32 %v249, %v257
        %s260 = sld [smem:[#allocation3 + $0xb]]
        %s261 = scalar_lea.vmem %s231, 3
        %v262 = vld [vmem:[%s261] ss:$4 sm:$0xf]
        %s263 = scalar_lea.vmem %s231, 67
        %v264 = vld [vmem:[%s263] ss:$4 sm:$0xf]
        %v265 = vstv %s260
        %v266 = vmul.f32 %v265, %v262
        %v267 = vmul.f32 %v265, %v264
        %v268 = vadd.f32 %v258, %v266
        %v269 = vadd.f32 %v259, %v267
        %s270 = sld [smem:[#allocation3 + $0xc]]
        %s271 = scalar_lea.vmem %s150, 48
        %v272 = vld [vmem:[%s271] ss:$4 sm:$0xf]
        %s273 = scalar_lea.vmem %s271, 64
        %v274 = vld [vmem:[%s273] ss:$4 sm:$0xf]
        %v275 = vstv %s270
        %v276 = vmul.f32 %v275, %v272
        %v277 = vmul.f32 %v275, %v274
        %v278 = vadd.f32 %v268, %v276
        %v279 = vadd.f32 %v269, %v277
        %s280 = sld [smem:[#allocation3 + $0xd]]
        %s281 = scalar_lea.vmem %s271, 1
        %v282 = vld [vmem:[%s281] ss:$4 sm:$0xf]
        %s283 = scalar_lea.vmem %s271, 65
        %v284 = vld [vmem:[%s283] ss:$4 sm:$0xf]
        %v285 = vstv %s280
        %v286 = vmul.f32 %v285, %v282
        %v287 = vmul.f32 %v285, %v284
        %v288 = vadd.f32 %v278, %v286
        %v289 = vadd.f32 %v279, %v287
        %s290 = sld [smem:[#allocation3 + $0xe]]
        %s291 = scalar_lea.vmem %s271, 2
        %v292 = vld [vmem:[%s291] ss:$4 sm:$0xf]
        %s293 = scalar_lea.vmem %s271, 66
        %v294 = vld [vmem:[%s293] ss:$4 sm:$0xf]
        %v295 = vstv %s290
        %v296 = vmul.f32 %v295, %v292
        %v297 = vmul.f32 %v295, %v294
        %v298 = vadd.f32 %v288, %v296
        %v299 = vadd.f32 %v289, %v297
        %s300 = sld [smem:[#allocation3 + $0xf]]
        %s301 = scalar_lea.vmem %s271, 3
        %v302 = vld [vmem:[%s301] ss:$4 sm:$0xf]
        %s303 = scalar_lea.vmem %s271, 67
        %v304 = vld [vmem:[%s303] ss:$4 sm:$0xf]
        %v305 = vstv %s300
        %v306 = vmul.f32 %v305, %v302
        %v307 = vmul.f32 %v305, %v304
        %v308 = vadd.f32 %v298, %v306
        %v309 = vadd.f32 %v299, %v307
        %vm310 = vcmask 60416
        %311 = vst.msk [vmem:[%s141] sm:$0xf] %vm310, %v308
        %312 = vst.msk [vmem:[%s141 + $0x4] sm:$0xf] %vm310, %v309
        %s313 = sand.u32 %s72, 1
        %s314 = scalar_lea.sflag [#allocation5], %s313
        %s315 = sand.u32 %s72, 1
        %s316 = smul.addr %s315, 8
        %s317 = scalar_lea.vmem [#allocation4], %s316
        // Predicated region
        $region25: #{tpu_custom_call.1} parent=23 // pred_check
          %p318 = pneg %p82
        $region26: #{tpu_custom_call.1} parent=23 // pred_check_branch
          %320 = sbr.rel (%p318) target = $region28
        $region27: #{tpu_custom_call.1} parent=23 // pred_region
          %s321 = smul.u32 2, %s27
          %s323 = ssub.s32 128, 128
          %324 = vsyncadd %s314, %s323
          %s325 = sadd.s32 %s26, %s321
          %s326 = smul.addr %s325, 64
          %s327 = scalar_lea.hbm %s2, %s326
          %s328 = sshll.u32 %s317, 4
          %s329 = int_to_ptr.vmem [resolvable:$true] %s328
          %334 = dma.vmem_to_hbm [thread:$0]  %s329, 128, %s327, %s314, 64, 64, 4
        $region28: #{tpu_custom_call.1} parent=23 // pred_fallthru
          _
      $region24: #{tpu_custom_call.1} parent=5 // pred_fallthru
        _
      %p335 = scmp.le.s32.totalorder 2, %s17
      // Predicated region
      $region29: #{tpu_custom_call.1} parent=5 // pred_check
        %p336 = pneg %p335
      $region30: #{tpu_custom_call.1} parent=5 // pred_check_branch
        %338 = sbr.rel (%p336) target = $region32
      $region31: #{tpu_custom_call.1} parent=5 // pred_region
        %s339 = ssub.s32 %s17, 2
        // Predicated region
        $region33: #{tpu_custom_call.1} parent=31 // pred_check
          %p340 = pneg %p88
        $region34: #{tpu_custom_call.1} parent=31 // pred_check_branch
          %342 = sbr.rel (%p340) target = $region36
        $region35: #{tpu_custom_call.1} parent=31 // pred_region
          %s343 = sand.u32 %s73, 1
          %s344 = scalar_lea.sflag [#allocation5], %s343
          %s345 = sand.u32 %s73, 1
          %s346 = smul.addr %s345, 8
          %s347 = scalar_lea.vmem [#allocation4], %s346
          %348 = dma.done %s344, 128
        $region36: #{tpu_custom_call.1} parent=31 // pred_fallthru
          _
      $region32: #{tpu_custom_call.1} parent=5 // pred_fallthru
        _
    $region6: #{tpu_custom_call.1} parent=1 // loop_footer
      %s21 = sadd.s32 1, %s17
    $region7: #{tpu_custom_call.1} parent=1 // loop_footer_branch
      %16 = sbr.rel target = $region3
    $region8: #{tpu_custom_call.1} parent=1 // loop_exit
      _
    %349 = vsyncpa [#allocation5], 1
    %s350 = scalar_lea.sflag [#allocation5], 1
    %351 = vsyncpa %s350, 1

</llo_original>
